<compile_context>
chip_gen: v6e
topology: v6e:2x2x1
jax: 0.10.0
libtpu: 0.0.40
codegen_flags: <defaults>
</compile_context>

<pallas_src>
import jax
import jax.numpy as jnp
from jax.experimental import pallas as pl
from jax.experimental.pallas import tpu as pltpu

_LANE = 128


def _argmax_kernel(x_ref, o_ref):
    # x_ref: (1, C, TILE_S, 128)   o_ref: (1, TILE_S, 128)
    c = x_ref.shape[1]
    is_float = jnp.issubdtype(x_ref.dtype, jnp.floating)

    m = x_ref[0, 0]                                  # (TILE_S, 128)
    idx = jnp.zeros(m.shape, dtype=jnp.int32)
    # Running (first-occurrence) max/argmax over the C planes: dense VPU
    # compare + selects, one plane load at a time.  C is static and small,
    # so a fully unrolled loop is fine.
    for k in range(1, c):
        xk = x_ref[0, k]
        better = xk > m
        if is_float:
            # Match jnp/np argmax NaN semantics: the first NaN wins.
            better = better | (jnp.isnan(xk) & jnp.logical_not(jnp.isnan(m)))
        idx = jnp.where(better, jnp.int32(k), idx)
        m = jnp.where(better, xk, m)
    o_ref[0] = idx


def _pick_tile_s(c, itemsize):
    # Keep the double-buffered input (+ int32 output) footprint under ~8 MiB so
    # the default scoped-VMEM limit is safe on v5e (16 MiB) as well as
    # v6e/v7x (32 MiB), while using the largest tile allowed (fewer grid steps
    # -> less per-step overhead, better DMA overlap).
    budget = 8 * 1024 * 1024
    per_sublane = 2 * _LANE * (c * itemsize + 4)     # dbl-buffered in + out
    ts = budget // per_sublane
    ts = (ts // 8) * 8
    return int(max(8, min(512, ts)))


def argmax_channels(x):
    """x: (N, C, H, W) -> (N, H, W) int32 argmax over C (== torch.argmax(x, 1))."""
    n, c, h, w = x.shape
    hw = h * w
    s = -(-hw // _LANE)                              # ceil(hw / 128)

    max_ts = _pick_tile_s(c, jnp.dtype(x.dtype).itemsize)
    if s <= max_ts:
        tile_s = s                                   # full-extent block is legal
        s_pad = s
    else:
        tile_s = max_ts
        s_pad = -(-s // tile_s) * tile_s
    hw_pad = s_pad * _LANE

    x2 = x.reshape(n, c, hw)
    if hw_pad != hw:
        # Padded columns are sliced off after the kernel, so the pad value is
        # irrelevant for the kept region.
        x2 = jnp.pad(x2, ((0, 0), (0, 0), (0, hw_pad - hw)))
    # (N, C, S, 128): C-reduction is elementwise across dense (TILE_S, 128)
    # planes; the output block is dense -> unmasked stores.
    x3 = x2.reshape(n, c, s_pad, _LANE)

    out = pl.pallas_call(
        _argmax_kernel,
        out_shape=jax.ShapeDtypeStruct((n, s_pad, _LANE), jnp.int32),
        grid_spec=pltpu.PrefetchScalarGridSpec(
            num_scalar_prefetch=0,
            grid=(n, s_pad // tile_s),
            in_specs=[pl.BlockSpec((1, c, tile_s, _LANE),
                                   lambda i, j: (i, 0, j, 0))],
            out_specs=pl.BlockSpec((1, tile_s, _LANE),
                                   lambda i, j: (i, j, 0)),
        ),
        compiler_params=pltpu.CompilerParams(
            dimension_semantics=("parallel", "parallel")),
    )(x3)

    out = out.reshape(n, hw_pad)
    if hw_pad != hw:
        out = out[:, :hw]
    return out.reshape(n, h, w)


if __name__ == "__main__":
    key = jax.random.PRNGKey(0)
    # small shapes consistent with an NCHW segmentation-logits tensor
    x = jax.random.normal(key, (2, 4, 16, 16), dtype=jnp.float32)

    y = jax.block_until_ready(argmax_channels(x))

    # sanity check against plain-JAX reference (same semantics as torch.argmax(x, dim=1))
    ref = jnp.argmax(x, axis=1).astype(jnp.int32)
    assert y.shape == (2, 16, 16), y.shape
    assert bool(jnp.all(y == ref)), "mismatch vs jnp.argmax reference"

    print("KERNEL_OK")
</pallas_src>

<mosaic_0001>
module attributes {stable_mosaic.version = 11 : i64} {
  func.func @_argmax_kernel(%arg0: i32, %arg1: i32, %arg2: memref<1x4x2x128xf32, #tpu.memory_space<vmem>>, %arg3: memref<1x2x128xi32, #tpu.memory_space<vmem>>) attributes {dimension_semantics = [#tpu.dimension_semantics<parallel>, #tpu.dimension_semantics<parallel>], iteration_bounds = array<i64: 2, 1>, scalar_prefetch = 0 : i64, scratch_operands = 0 : i64, tpu.core_type = #tpu.core_type<tc>, window_params = [{transform_indices = @transform_0, window_bounds = array<i64: 1, 4, 2, 128>}, {transform_indices = @transform_1, window_bounds = array<i64: 1, 2, 128>}]} {
    %c0 = arith.constant 0 : index
    %c0_0 = arith.constant 0 : index
    %c0_1 = arith.constant 0 : index
    %c0_2 = arith.constant 0 : index
    %0 = vector.load %arg2[%c0, %c0_0, %c0_1, %c0_2] : memref<1x4x2x128xf32, #tpu.memory_space<vmem>>, vector<1x1x2x128xf32>
    %1 = vector.shape_cast %0 : vector<1x1x2x128xf32> to vector<2x128xf32>
    %c0_i32 = arith.constant 0 : i32
    %2 = vector.broadcast %c0_i32 : i32 to vector<2x128xi32>
    %c0_3 = arith.constant 0 : index
    %c1 = arith.constant 1 : index
    %c0_4 = arith.constant 0 : index
    %c0_5 = arith.constant 0 : index
    %3 = vector.load %arg2[%c0_3, %c1, %c0_4, %c0_5] : memref<1x4x2x128xf32, #tpu.memory_space<vmem>>, vector<1x1x2x128xf32>
    %4 = vector.shape_cast %3 : vector<1x1x2x128xf32> to vector<2x128xf32>
    %5 = arith.cmpf ogt, %4, %1 : vector<2x128xf32>
    %6 = arith.cmpf one, %4, %4 : vector<2x128xf32>
    %7 = arith.cmpf one, %1, %1 : vector<2x128xf32>
    %cst = arith.constant dense<true> : vector<2x128xi1>
    %8 = arith.xori %7, %cst : vector<2x128xi1>
    %9 = arith.andi %6, %8 : vector<2x128xi1>
    %10 = arith.ori %5, %9 : vector<2x128xi1>
    %c1_i32 = arith.constant 1 : i32
    %11 = vector.broadcast %c1_i32 : i32 to vector<2x128xi32>
    %12 = arith.select %10, %11, %2 : vector<2x128xi1>, vector<2x128xi32>
    %13 = arith.select %10, %4, %1 : vector<2x128xi1>, vector<2x128xf32>
    %c0_6 = arith.constant 0 : index
    %c2 = arith.constant 2 : index
    %c0_7 = arith.constant 0 : index
    %c0_8 = arith.constant 0 : index
    %14 = vector.load %arg2[%c0_6, %c2, %c0_7, %c0_8] : memref<1x4x2x128xf32, #tpu.memory_space<vmem>>, vector<1x1x2x128xf32>
    %15 = vector.shape_cast %14 : vector<1x1x2x128xf32> to vector<2x128xf32>
    %16 = arith.cmpf ogt, %15, %13 : vector<2x128xf32>
    %17 = arith.cmpf one, %15, %15 : vector<2x128xf32>
    %18 = arith.cmpf one, %13, %13 : vector<2x128xf32>
    %cst_9 = arith.constant dense<true> : vector<2x128xi1>
    %19 = arith.xori %18, %cst_9 : vector<2x128xi1>
    %20 = arith.andi %17, %19 : vector<2x128xi1>
    %21 = arith.ori %16, %20 : vector<2x128xi1>
    %c2_i32 = arith.constant 2 : i32
    %22 = vector.broadcast %c2_i32 : i32 to vector<2x128xi32>
    %23 = arith.select %21, %22, %12 : vector<2x128xi1>, vector<2x128xi32>
    %24 = arith.select %21, %15, %13 : vector<2x128xi1>, vector<2x128xf32>
    %c0_10 = arith.constant 0 : index
    %c3 = arith.constant 3 : index
    %c0_11 = arith.constant 0 : index
    %c0_12 = arith.constant 0 : index
    %25 = vector.load %arg2[%c0_10, %c3, %c0_11, %c0_12] : memref<1x4x2x128xf32, #tpu.memory_space<vmem>>, vector<1x1x2x128xf32>
    %26 = vector.shape_cast %25 : vector<1x1x2x128xf32> to vector<2x128xf32>
    %27 = arith.cmpf ogt, %26, %24 : vector<2x128xf32>
    %28 = arith.cmpf one, %26, %26 : vector<2x128xf32>
    %29 = arith.cmpf one, %24, %24 : vector<2x128xf32>
    %cst_13 = arith.constant dense<true> : vector<2x128xi1>
    %30 = arith.xori %29, %cst_13 : vector<2x128xi1>
    %31 = arith.andi %28, %30 : vector<2x128xi1>
    %32 = arith.ori %27, %31 : vector<2x128xi1>
    %c3_i32 = arith.constant 3 : i32
    %33 = vector.broadcast %c3_i32 : i32 to vector<2x128xi32>
    %34 = arith.select %32, %33, %23 : vector<2x128xi1>, vector<2x128xi32>
    %c0_14 = arith.constant 0 : index
    %c0_15 = arith.constant 0 : index
    %c0_16 = arith.constant 0 : index
    %35 = vector.load %arg3[%c0_14, %c0_15, %c0_16] : memref<1x2x128xi32, #tpu.memory_space<vmem>>, vector<1x2x128xi32>
    %36 = vector.shape_cast %35 : vector<1x2x128xi32> to vector<2x128xi32>
    %37 = vector.shape_cast %34 : vector<2x128xi32> to vector<1x2x128xi32>
    tpu.vector_store %arg3[%c0_14, %c0_15, %c0_16], %37 {strides = array<i32>} : memref<1x2x128xi32, #tpu.memory_space<vmem>>, vector<1x2x128xi32>,
    return
  }
  func.func @transform_0(%arg0: i32, %arg1: i32) -> (i32, i32, i32, i32) {
    %c0_i32 = arith.constant 0 : i32
    %c0_i32_0 = arith.constant 0 : i32
    %c0_i32_1 = arith.constant 0 : i32
    return %arg0, %c0_i32, %arg1, %c0_i32_0 : i32, i32, i32, i32
  }
  func.func @transform_1(%arg0: i32, %arg1: i32) -> (i32, i32, i32) {
    %c0_i32 = arith.constant 0 : i32
    %c0_i32_0 = arith.constant 0 : i32
    return %arg0, %arg1, %c0_i32 : i32, i32, i32
  }
}

</mosaic_0001>

<llo_original>
// kernel: tpu_custom_call.1
$region0: #{tpu_custom_call.1}
  #allocation0 [shape = 'u32[]', space=smem, size = 0x4, offset = 0x4, fixed_abs, tag = 'smem constant byte address 0x4 - core index']
  #allocation1 [shape = 'u32[144,128]{1,0:T(1,128)}', space=vmem, size = 0x12000, scoped, tag = 'internal scratch']
  %s0 = inlined_call_operand.hbm [shape: f32[2,4,2,128], index: 0, kind: input, shape index: {}]
  %s1 = inlined_call_operand.hbm [shape: s32[2,2,128], index: 1, kind: output, shape index: {}]
  %s2 = sld [smem:[#allocation0]]
  $region41: #{tpu_custom_call.1} parent=0
    _
  %s4 = ssub.s32 1, %s2
  %s5 = scalar_select 0, %s4, %s2
  $region1: #{tpu_custom_call.1} parent=0
    #allocation2 [shape = 'u8[8192]{0}', space=vmem, size = 0x2000, scoped, tag = 'input window, operand 0']
    #allocation3 [shape = 's32[2]{0}', space=sflag, size = 0x8, scoped, tag = 'scoped memory for tpu_custom_call.1']
    #allocation4 [shape = 's32[2]{0}', space=sflag, size = 0x8, scoped, tag = 'scoped memory for tpu_custom_call.1']
    #allocation5 [shape = 'u8[2048]{0}', space=vmem, size = 0x800, scoped, tag = 'output window, operand 0']
    %6 = vsyncpa [#allocation3], 0
    %s7 = scalar_lea.sflag [#allocation3], 1
    %8 = vsyncpa %s7, 0
    %9 = vsyncpa [#allocation4], 0
    %s10 = scalar_lea.sflag [#allocation4], 1
    %11 = vsyncpa %s10, 0
    loop: start=0, step=1, limit=4
    $region2: #{tpu_custom_call.1} parent=1 // loop_pre_header
      _
    $region3: #{tpu_custom_call.1} parent=1 // loop_header
      %s13 = sphi 0, %s17
      %p14 = scmp.ge.s32.totalorder %s13, 4
      %s20 = sphi 0, %s32
      %s21 = sphi 0, %s28
      %s22 = sphi 0, %s20
      %s23 = sphi 0, %s21
      %s24 = sphi 0, %s22
      %s25 = sphi 0, %s23
      %s37 = sphi 0, %s39
      %s40 = sphi 0, %s37
      %s41 = sphi 0, %s40
      %s57 = sphi 0, %s41
      %s65 = sphi 0, %s67
      %s68 = sphi 0, %s65
      %s69 = sphi 0, %s68
      %s85 = sphi 0, %s69
    $region4: #{tpu_custom_call.1} parent=1 // loop_header_branch
      %16 = sbr.rel (%p14) target = $region8
    $region5: #{tpu_custom_call.1} parent=1 // loop_body
      %s18 = ssub.s32 %s13, 1
      %s19 = ssub.s32 %s13, 2
      %s26 = sadd.s32 1, %s21
      %p27 = scmp.ge.s32.totalorder %s26, 1
      %s28 = scalar_select %p27, 0, %s26
      %s29 = sadd.s32 1, %s20
      %s30 = scalar_select %p27, %s29, %s20
      %p31 = scmp.ge.s32.totalorder %s30, 2
      %s32 = scalar_select %p31, 0, %s30
      %s33 = ssub.s32 %s20, %s32
      %s34 = ssub.s32 %s21, %s28
      %s35 = sor.u32 %s33, %s34
      %p36 = scmp.eq.s32.totalorder %s35, 0
      %s38 = sadd.s32 %s37, 1
      %s39 = scalar_select %p36, %s37, %s38
      %p42 = pneg %p36
      %p43 = scmp.eq.s32.totalorder %s13, 1
      %p44 = por %p42, %p43
      %p45 = scmp.ne.s32.totalorder %s37, %s40
      %p46 = scmp.eq.s32.totalorder %s13, 0
      %p47 = por %p45, %p46
      %p48 = scmp.ne.s32.totalorder %s37, %s40
      %p49 = scmp.eq.s32.totalorder %s18, 1
      %p50 = por %p48, %p49
      %p51 = scmp.ne.s32.totalorder %s40, %s41
      %p52 = scmp.eq.s32.totalorder %s18, 0
      %p53 = por %p51, %p52
      %p54 = scmp.ne.s32.totalorder %s40, %s41
      %p55 = scmp.eq.s32.totalorder %s19, 1
      %p56 = por %p54, %p55
      %p58 = scmp.ne.s32.totalorder %s41, %s57
      %p59 = scmp.eq.s32.totalorder %s19, 0
      %p60 = por %p58, %p59
      %s61 = ssub.s32 %s20, %s32
      %s62 = ssub.s32 %s21, %s28
      %s63 = sor.u32 %s61, %s62
      %p64 = scmp.eq.s32.totalorder %s63, 0
      %s66 = sadd.s32 %s65, 1
      %s67 = scalar_select %p64, %s65, %s66
      %p70 = pneg %p64
      %p71 = scmp.eq.s32.totalorder %s13, 1
      %p72 = por %p70, %p71
      %p73 = scmp.ne.s32.totalorder %s65, %s68
      %p74 = scmp.eq.s32.totalorder %s13, 0
      %p75 = por %p73, %p74
      %p76 = scmp.ne.s32.totalorder %s65, %s68
      %p77 = scmp.eq.s32.totalorder %s18, 1
      %p78 = por %p76, %p77
      %p79 = scmp.ne.s32.totalorder %s68, %s69
      %p80 = scmp.eq.s32.totalorder %s18, 0
      %p81 = por %p79, %p80
      %p82 = scmp.ne.s32.totalorder %s68, %s69
      %p83 = scmp.eq.s32.totalorder %s19, 1
      %p84 = por %p82, %p83
      %p86 = scmp.ne.s32.totalorder %s69, %s85
      %p87 = scmp.eq.s32.totalorder %s19, 0
      %p88 = por %p86, %p87
      %p89 = scmp.le.s32.totalorder 1, %s13
      %p90 = scmp.lt.s32.totalorder %s13, 3
      %p91 = pnand %p89, %p90
      %p92 = pneg %p91
      // Predicated region
      $region9: #{tpu_custom_call.1} parent=5 // pred_check
        _
      $region10: #{tpu_custom_call.1} parent=5 // pred_check_branch
        %94 = sbr.rel (%p91) target = $region12
      $region11: #{tpu_custom_call.1} parent=5 // pred_region
        %s95 = ssub.s32 %s13, 1
      $region12: #{tpu_custom_call.1} parent=5 // pred_fallthru
        _
      %p96 = scmp.lt.s32.totalorder %s13, 2
      // Predicated region
      $region13: #{tpu_custom_call.1} parent=5 // pred_check
        %p97 = pneg %p96
      $region14: #{tpu_custom_call.1} parent=5 // pred_check_branch
        %99 = sbr.rel (%p97) target = $region16
      $region15: #{tpu_custom_call.1} parent=5 // pred_region
        // Predicated region
        $region17: #{tpu_custom_call.1} parent=15 // pred_check
          %p100 = pneg %p47
        $region18: #{tpu_custom_call.1} parent=15 // pred_check_branch
          %102 = sbr.rel (%p100) target = $region20
        $region19: #{tpu_custom_call.1} parent=15 // pred_region
          %s103 = sand.u32 %s37, 1
          %s104 = scalar_lea.sflag [#allocation3], %s103
          %s105 = sand.u32 %s37, 1
          %s106 = smul.addr %s105, 8
          %s107 = scalar_lea.vmem [#allocation2], %s106
          %s109 = ssub.s32 128, 128
          %110 = vsyncadd %s104, %s109
          %s111 = smul.addr %s20, 4
          %s112 = sadd.s32 %s21, %s111
          %s113 = smul.addr %s112, 32
          %s114 = scalar_lea.hbm %s0, %s113
          %s115 = sshll.u32 %s107, 4
          %s116 = int_to_ptr.vmem [resolvable:$true] %s115
          %121 = dma.hbm_to_vmem [thread:$0]  %s114, 128, %s116, %s104, 32, 32, 2
        $region20: #{tpu_custom_call.1} parent=15 // pred_fallthru
          _
      $region16: #{tpu_custom_call.1} parent=5 // pred_fallthru
        _
      %p122 = scmp.le.s32.totalorder 1, %s13
      %p123 = scmp.lt.s32.totalorder %s13, 3
      %p124 = pnand %p122, %p123
      %p125 = pneg %p124
      // Predicated region
      $region21: #{tpu_custom_call.1} parent=5 // pred_check
        _
      $region22: #{tpu_custom_call.1} parent=5 // pred_check_branch
        %127 = sbr.rel (%p124) target = $region24
      $region23: #{tpu_custom_call.1} parent=5 // pred_region
        %s128 = ssub.s32 %s13, 1
        %s129 = sand.u32 %s40, 1
        %s130 = scalar_lea.sflag [#allocation3], %s129
        %s131 = sand.u32 %s40, 1
        %s132 = smul.addr %s131, 8
        %s133 = scalar_lea.vmem [#allocation2], %s132
        // Predicated region
        $region25: #{tpu_custom_call.1} parent=23 // pred_check
          %p134 = pneg %p53
        $region26: #{tpu_custom_call.1} parent=23 // pred_check_branch
          %136 = sbr.rel (%p134) target = $region28
        $region27: #{tpu_custom_call.1} parent=23 // pred_region
          %137 = dma.done %s130, 128
        $region28: #{tpu_custom_call.1} parent=23 // pred_fallthru
          _
        %s138 = sand.u32 %s40, 1
        %s139 = scalar_lea.sflag [#allocation3], %s138
        %s140 = sand.u32 %s40, 1
        %s141 = smul.addr %s140, 8
        %s142 = scalar_lea.vmem [#allocation2], %s141
        %p143 = pneg %p53
        %p144 = pneg %p50
        %p145 = pneg %p81
        %p146 = pneg %p78
        %s147 = sand.u32 %s68, 1
        %s148 = scalar_lea.sflag [#allocation4], %s147
        %s149 = sand.u32 %s68, 1
        %s150 = smul.addr %s149, 2
        %s151 = scalar_lea.vmem [#allocation5], %s150
        %v152 = vld [vmem:[%s133] sm:$0x3]
        %s153 = scalar_lea.vmem %s133, 2 [#allocation2]
        %v154 = vld [vmem:[%s153] sm:$0x3]
        %vm155 = vcmp.gt.f32.partialorder %v154, %v152
        %vm156 = vcmp.ne.f32.partialorder %v154, %v154
        %vm157 = vcmp.ne.f32.partialorder %v152, %v152
        %vm158 = vmxor %vm157, 1
        %vm159 = vmand %vm156, %vm158
        %vm160 = vmor %vm155, %vm159
        %v161 = vsel %vm160, 1, 0
        %v162 = vsel %vm160, %v154, %v152
        %s163 = scalar_lea.vmem %s133, 4 [#allocation2]
        %v164 = vld [vmem:[%s163] sm:$0x3]
        %vm165 = vcmp.gt.f32.partialorder %v164, %v162
        %vm166 = vcmp.ne.f32.partialorder %v164, %v164
        %vm167 = vcmp.ne.f32.partialorder %v162, %v162
        %vm168 = vmxor %vm167, 1
        %vm169 = vmand %vm166, %vm168
        %vm170 = vmor %vm165, %vm169
        %v171 = vsel %vm170, 2, %v161
        %v172 = vsel %vm170, %v164, %v162
        %s173 = scalar_lea.vmem %s133, 6 [#allocation2]
        %v174 = vld [vmem:[%s173] sm:$0x3]
        %vm175 = vcmp.gt.f32.partialorder %v174, %v172
        %vm176 = vcmp.ne.f32.partialorder %v174, %v174
        %vm177 = vcmp.ne.f32.partialorder %v172, %v172
        %vm178 = vmxor %vm177, 1
        %vm179 = vmand %vm176, %vm178
        %vm180 = vmor %vm175, %vm179
        %v181 = vsel %vm180, 3, %v171
        %182 = vst [vmem:[%s151] sm:$0x3] %v181
        %s183 = sand.u32 %s68, 1
        %s184 = scalar_lea.sflag [#allocation4], %s183
        %s185 = sand.u32 %s68, 1
        %s186 = smul.addr %s185, 2
        %s187 = scalar_lea.vmem [#allocation5], %s186
        // Predicated region
        $region29: #{tpu_custom_call.1} parent=23 // pred_check
          %p188 = pneg %p78
        $region30: #{tpu_custom_call.1} parent=23 // pred_check_branch
          %190 = sbr.rel (%p188) target = $region32
        $region31: #{tpu_custom_call.1} parent=23 // pred_region
          %s192 = ssub.s32 32, 32
          %193 = vsyncadd %s184, %s192
          %s194 = sadd.s32 %s23, %s22
          %s195 = smul.addr %s194, 32
          %s196 = scalar_lea.hbm %s1, %s195
          %s198 = sshll.u32 %s187, 4
          %s199 = int_to_ptr.vmem [resolvable:$true] %s198
          %201 = dma.vmem_to_hbm [thread:$0]  %s199, 32, %s196, %s184
        $region32: #{tpu_custom_call.1} parent=23 // pred_fallthru
          _
      $region24: #{tpu_custom_call.1} parent=5 // pred_fallthru
        _
      %p202 = scmp.le.s32.totalorder 2, %s13
      // Predicated region
      $region33: #{tpu_custom_call.1} parent=5 // pred_check
        %p203 = pneg %p202
      $region34: #{tpu_custom_call.1} parent=5 // pred_check_branch
        %205 = sbr.rel (%p203) target = $region36
      $region35: #{tpu_custom_call.1} parent=5 // pred_region
        %s206 = ssub.s32 %s13, 2
        // Predicated region
        $region37: #{tpu_custom_call.1} parent=35 // pred_check
          %p207 = pneg %p84
        $region38: #{tpu_custom_call.1} parent=35 // pred_check_branch
          %209 = sbr.rel (%p207) target = $region40
        $region39: #{tpu_custom_call.1} parent=35 // pred_region
          %s210 = sand.u32 %s69, 1
          %s211 = scalar_lea.sflag [#allocation4], %s210
          %s212 = sand.u32 %s69, 1
          %s213 = smul.addr %s212, 2
          %s214 = scalar_lea.vmem [#allocation5], %s213
          %215 = dma.done %s211, 32
        $region40: #{tpu_custom_call.1} parent=35 // pred_fallthru
          _
      $region36: #{tpu_custom_call.1} parent=5 // pred_fallthru
        _
    $region6: #{tpu_custom_call.1} parent=1 // loop_footer
      %s17 = sadd.s32 1, %s13
    $region7: #{tpu_custom_call.1} parent=1 // loop_footer_branch
      %12 = sbr.rel target = $region3
    $region8: #{tpu_custom_call.1} parent=1 // loop_exit
      _
    %216 = vsyncpa [#allocation3], 1
    %s217 = scalar_lea.sflag [#allocation3], 1
    %218 = vsyncpa %s217, 1
    %219 = vsyncpa [#allocation4], 1
    %s220 = scalar_lea.sflag [#allocation4], 1
    %221 = vsyncpa %s220, 1

</llo_original>
